<compile_context>
chip_gen: v5e
topology: v5e:2x2
jax: 0.10.0
libtpu: 0.0.40
codegen_flags: <defaults>
</compile_context>

<pallas_src>
import jax
import jax.numpy as jnp
from jax.experimental import pallas as pl
from jax.experimental.pallas import tpu as pltpu

# ----------------------------- constants ------------------------------------
N_STATS = 14
EPS_FOCAL = 1e-6
EPS_JACC = 1e-6
EPS_DICE = 1e-7
IGNORE_INDEX = 255.0
GAMMA = 2.0
LANES = 128
TARGET_TILE_ROWS = 1024          # ~0.5 MiB per f32 input block; safe on v7x

# stat indices
(S_BCE_SUM,
 S_BFOC_SUM, S_BFOC_CNT,
 S_JACC_I, S_JACC_O, S_JACC_T,
 S_BDICE_I, S_BDICE_O, S_BDICE_T,
 S_RDICE_I, S_RDICE_O, S_RDICE_T,
 S_RFOC_SUM, S_RFOC_CNT) = range(N_STATS)


# ------------------------------ kernel --------------------------------------
def _make_kernel(sub):
    """Build the loss-stats kernel for a given accumulator sublane depth."""

    def kernel(xb_ref, tb_ref, xr_ref, tr_ref, acc_ref):
        # acc_ref: (1, N_STATS, sub, 128) f32 — resident across the inner axis.
        i = pl.program_id(1)

        @pl.when(i == 0)
        def _():
            acc_ref[...] = jnp.zeros_like(acc_ref)

        xb = xb_ref[...].astype(jnp.float32)
        tb = tb_ref[...].astype(jnp.float32)
        xr = xr_ref[...].astype(jnp.float32)
        tr = tr_ref[...].astype(jnp.float32)

        def red(v):
            # (tile_rows, 128) -> (sub, 128): pure VPU vreg adds, no XLU.
            return v.reshape(-1, sub, LANES).sum(axis=0)

        # ---- sigmoid of building logits (reused for BCE and jaccard) -------
        sig_b = jax.nn.sigmoid(xb)

        # ---- BCE with logits on buildings (stable; log(1+e^-|x|) = -log sig(|x|))
        softplus_neg_abs = -jnp.log(
            jnp.maximum(jnp.where(xb >= 0.0, sig_b, 1.0 - sig_b), 1e-30))
        bce = jnp.maximum(xb, 0.0) - xb * tb + softplus_neg_abs
        acc_ref[0, S_BCE_SUM] += red(bce)

        # ---- focal on buildings (RAW logits, as in the torch module) -------
        mask_b = (tb != IGNORE_INDEX).astype(jnp.float32)
        ob = jnp.clip(xb, EPS_FOCAL, 1.0 - EPS_FOCAL)
        tbc = jnp.clip(tb, EPS_FOCAL, 1.0 - EPS_FOCAL)
        pt_b = (1.0 - tbc) * (1.0 - ob) + tbc * ob
        foc_b = -((1.0 - pt_b) * (1.0 - pt_b)) * jnp.log(pt_b)
        acc_ref[0, S_BFOC_SUM] += red(foc_b * mask_b)
        acc_ref[0, S_BFOC_CNT] += red(mask_b)

        # ---- jaccard on buildings (sigmoid vs. hard targets) ---------------
        jt = (tb == 1.0).astype(jnp.float32)
        acc_ref[0, S_JACC_I] += red(sig_b * jt)
        acc_ref[0, S_JACC_O] += red(sig_b)
        acc_ref[0, S_JACC_T] += red(jt)

        # ---- soft dice on buildings (RAW logits, per_image=False) ----------
        acc_ref[0, S_BDICE_I] += red(xb * tb)
        acc_ref[0, S_BDICE_O] += red(xb)
        acc_ref[0, S_BDICE_T] += red(tb)

        # ---- roads: forward applies sigmoid first ---------------------------
        sig_r = jax.nn.sigmoid(xr)

        # soft dice on roads (sigmoid outputs)
        acc_ref[0, S_RDICE_I] += red(sig_r * tr)
        acc_ref[0, S_RDICE_O] += red(sig_r)
        acc_ref[0, S_RDICE_T] += red(tr)

        # focal on roads (sigmoid outputs)
        mask_r = (tr != IGNORE_INDEX).astype(jnp.float32)
        orr = jnp.clip(sig_r, EPS_FOCAL, 1.0 - EPS_FOCAL)
        trc = jnp.clip(tr, EPS_FOCAL, 1.0 - EPS_FOCAL)
        pt_r = (1.0 - trc) * (1.0 - orr) + trc * orr
        foc_r = -((1.0 - pt_r) * (1.0 - pt_r)) * jnp.log(pt_r)
        acc_ref[0, S_RFOC_SUM] += red(foc_r * mask_r)
        acc_ref[0, S_RFOC_CNT] += red(mask_r)

    return kernel


# ----------------------------- wrapper ---------------------------------------
def _pick_tile_rows(rows, cap=TARGET_TILE_ROWS):
    """Largest row-tile that divides `rows` exactly and respects (8,128) tiling."""
    if rows % 8 == 0:
        q = rows // 8
        best = 1
        for d in range(1, min(q, cap // 8) + 1):
            if q % d == 0:
                best = d
        return 8 * best
    # Odd/small case: one full block (block == full dims, so tiling rule holds).
    # TODO(synk): pad+mask path for huge inputs whose row count isn't a multiple of 8.
    return rows


def _loss_stats(out_buildings, out_roads, targets_buildings, targets_roads):
    """Returns the 14 global statistics (f32 vector) via a streaming Pallas kernel."""
    n = int(out_buildings.size)
    assert n % LANES == 0, "element count must be a multiple of 128"
    rows = n // LANES

    def slab(x):
        return x.reshape(rows, LANES)   # keep native dtype; cast inside kernel

    xb, tb = slab(out_buildings), slab(targets_buildings)
    xr, tr = slab(out_roads), slab(targets_roads)

    tile_rows = _pick_tile_rows(rows)
    steps = rows // tile_rows
    # Leading "parallel" axis: lets v7x shard the two slices across its 2 TCs.
    num_slices = 2 if (steps >= 2 and steps % 2 == 0) else 1
    steps_per_slice = steps // num_slices
    sub = 8 if tile_rows % 8 == 0 else tile_rows

    in_spec = pl.BlockSpec((tile_rows, LANES),
                           lambda c, i: (c * steps_per_slice + i, 0))
    out_spec = pl.BlockSpec((1, N_STATS, sub, LANES), lambda c, i: (c, 0, 0, 0))

    bytes_accessed = sum(int(a.size) * a.dtype.itemsize for a in (xb, tb, xr, tr))
    bytes_accessed += num_slices * N_STATS * sub * LANES * 4
    cost = pl.CostEstimate(flops=40 * n,
                           transcendentals=5 * n,
                           bytes_accessed=bytes_accessed)

    partial = pl.pallas_call(
        _make_kernel(sub),
        out_shape=jax.ShapeDtypeStruct((num_slices, N_STATS, sub, LANES),
                                       jnp.float32),
        grid_spec=pltpu.PrefetchScalarGridSpec(
            num_scalar_prefetch=0,
            grid=(num_slices, steps_per_slice),
            in_specs=[in_spec, in_spec, in_spec, in_spec],
            out_specs=out_spec,
        ),
        compiler_params=pltpu.CompilerParams(
            dimension_semantics=("parallel", "arbitrary"),
            vmem_limit_bytes=32 * 1024 * 1024,
        ),
        cost_estimate=cost,
    )(xb, tb, xr, tr)

    # Tiny epilogue reduction (num_slices * 14 * sub * 128 floats) in plain JAX.
    return partial.sum(axis=(0, 2, 3))


# --------------------------- ComputeLoss wrapper -----------------------------
class ComputeLossPallas:
    """JAX/Pallas port of ComputeLoss.forward (loss weights fixed at init)."""

    def __init__(self, building_weight=0.5, road_weight=0.5, bce_loss=0.0,
                 road_dice_loss=0.0, road_focal_loss=0.0, building_jaccard=0.0,
                 building_focal=0.0, building_dice=0.0):
        self.bce_loss = bce_loss
        self.road_dice_loss = road_dice_loss
        self.road_focal_loss = road_focal_loss
        self.building_jaccard = building_jaccard
        self.building_focal = building_focal
        self.building_dice = building_dice
        self.building_weight = building_weight
        self.road_weight = road_weight

    def __call__(self, out_buildings, out_roads, targets_buildings, targets_roads):
        n_elem = float(out_buildings.size)
        s = _loss_stats(out_buildings, out_roads, targets_buildings, targets_roads)

        building_loss = jnp.float32(0.0)
        road_loss = jnp.float32(0.0)

        if self.bce_loss:
            building_loss = building_loss + self.bce_loss * (s[S_BCE_SUM] / n_elem)
        if self.road_dice_loss:
            union = s[S_RDICE_O] + s[S_RDICE_T] + EPS_DICE
            dice = 1.0 - (2.0 * s[S_RDICE_I] + EPS_DICE) / union
            road_loss = road_loss + self.road_dice_loss * dice
        if self.road_focal_loss:
            road_loss = road_loss + self.road_focal_loss * (s[S_RFOC_SUM] / s[S_RFOC_CNT])
        if self.building_focal:
            building_loss = building_loss + self.building_focal * (s[S_BFOC_SUM] / s[S_BFOC_CNT])
        if self.building_jaccard:
            score = (s[S_JACC_I] + EPS_JACC) / (s[S_JACC_O] + s[S_JACC_T] - s[S_JACC_I] + EPS_JACC)
            building_loss = building_loss + self.building_jaccard * (1.0 - score)
        if self.building_dice:
            union = s[S_BDICE_O] + s[S_BDICE_T] + EPS_DICE
            dice = 1.0 - (2.0 * s[S_BDICE_I] + EPS_DICE) / union
            building_loss = building_loss + self.building_dice * dice

        return self.building_weight * building_loss + self.road_weight * road_loss


# ------------------------- pure-JAX reference (no Pallas) --------------------
def _reference_loss(module, ob, orr, tb, tr):
    ob = ob.astype(jnp.float32); tb = tb.astype(jnp.float32)
    orr = orr.astype(jnp.float32); tr = tr.astype(jnp.float32)

    def focal_ref(outputs, targets):
        o = outputs.reshape(-1); t = targets.reshape(-1)
        mask = t != IGNORE_INDEX
        o = jnp.clip(o, EPS_FOCAL, 1.0 - EPS_FOCAL)
        t = jnp.clip(t, EPS_FOCAL, 1.0 - EPS_FOCAL)
        pt = (1.0 - t) * (1.0 - o) + t * o
        v = -((1.0 - pt) ** GAMMA) * jnp.log(pt)
        return jnp.sum(jnp.where(mask, v, 0.0)) / jnp.sum(mask)

    def jaccard_ref(outputs, targets):
        jt = (targets == 1.0).astype(jnp.float32)
        jo = jax.nn.sigmoid(outputs)
        i = jnp.sum(jo * jt)
        u = jnp.sum(jo) + jnp.sum(jt)
        return 1.0 - (i + EPS_JACC) / (u - i + EPS_JACC)

    def dice_ref(outputs, targets):
        o = outputs.reshape(1, -1); t = targets.reshape(1, -1)
        inter = jnp.sum(o * t, axis=1)
        union = jnp.sum(o, axis=1) + jnp.sum(t, axis=1) + EPS_DICE
        return jnp.mean(1.0 - (2.0 * inter + EPS_DICE) / union)

    def bce_ref(x, t):
        return jnp.mean(jnp.maximum(x, 0.0) - x * t + jnp.log1p(jnp.exp(-jnp.abs(x))))

    sr = jax.nn.sigmoid(orr)
    b_loss = 0.0
    r_loss = 0.0
    if module.bce_loss:
        b_loss = b_loss + module.bce_loss * bce_ref(ob, tb)
    if module.road_dice_loss:
        r_loss = r_loss + module.road_dice_loss * dice_ref(sr, tr)
    if module.road_focal_loss:
        r_loss = r_loss + module.road_focal_loss * focal_ref(sr, tr)
    if module.building_focal:
        b_loss = b_loss + module.building_focal * focal_ref(ob, tb)
    if module.building_jaccard:
        b_loss = b_loss + module.building_jaccard * jaccard_ref(ob, tb)
    if module.building_dice:
        b_loss = b_loss + module.building_dice * dice_ref(ob, tb)
    return module.building_weight * b_loss + module.road_weight * r_loss


# --------------------------------- main --------------------------------------
if __name__ == "__main__":
    # Enable every loss term (default-all-zero would make the loss trivially 0).
    module = ComputeLossPallas(
        building_weight=0.5, road_weight=0.5,
        bce_loss=1.0, road_dice_loss=1.0, road_focal_loss=1.0,
        building_jaccard=1.0, building_focal=1.0, building_dice=1.0,
    )

    key = jax.random.PRNGKey(0)
    k1, k2, k3, k4 = jax.random.split(key, 4)
    shape = (2, 1, 16, 16)  # NCHW, 512 elements per tensor

    out_buildings = jax.random.normal(k1, shape, dtype=jnp.float32)
    out_roads = jax.random.normal(k2, shape, dtype=jnp.float32)
    targets_buildings = (jax.random.uniform(k3, shape) > 0.5).astype(jnp.float32)
    targets_roads = (jax.random.uniform(k4, shape) > 0.5).astype(jnp.float32)

    loss = module(out_buildings, out_roads, targets_buildings, targets_roads)
    loss = jax.block_until_ready(loss)

    ref = jax.block_until_ready(
        _reference_loss(module, out_buildings, out_roads, targets_buildings, targets_roads)
    )

    assert jnp.isfinite(loss), "loss is not finite"
    assert abs(float(loss) - float(ref)) < 1e-4, (float(loss), float(ref))
    print("KERNEL_OK")
</pallas_src>

<mosaic_0001>
module attributes {stable_mosaic.version = 11 : i64} {
  func.func @kernel(%arg0: i32, %arg1: i32, %arg2: memref<4x128xf32, #tpu.memory_space<vmem>>, %arg3: memref<4x128xf32, #tpu.memory_space<vmem>>, %arg4: memref<4x128xf32, #tpu.memory_space<vmem>>, %arg5: memref<4x128xf32, #tpu.memory_space<vmem>>, %arg6: memref<1x14x4x128xf32, #tpu.memory_space<vmem>>) attributes {dimension_semantics = [#tpu.dimension_semantics<parallel>, #tpu.dimension_semantics<arbitrary>], iteration_bounds = array<i64: 1, 1>, scalar_prefetch = 0 : i64, scratch_operands = 0 : i64, tpu.core_type = #tpu.core_type<tc>, window_params = [{transform_indices = @transform_0, window_bounds = array<i64: 4, 128>}, {transform_indices = @transform_1, window_bounds = array<i64: 4, 128>}, {transform_indices = @transform_2, window_bounds = array<i64: 4, 128>}, {transform_indices = @transform_3, window_bounds = array<i64: 4, 128>}, {transform_indices = @transform_4, window_bounds = array<i64: 1, 14, 4, 128>}]} {
    %c0_i32 = arith.constant 0 : i32
    %0 = arith.cmpi eq, %arg1, %c0_i32 : i32
    %1 = arith.extui %0 : i1 to i32
    %c0_i32_0 = arith.constant 0 : i32
    %2 = arith.cmpi ne, %1, %c0_i32_0 : i32
    scf.if %2 {
      %cst_148 = arith.constant 0.000000e+00 : f32
      %209 = vector.broadcast %cst_148 : f32 to vector<1x14x4x128xf32>
      %c0_149 = arith.constant 0 : index
      %c0_150 = arith.constant 0 : index
      %c0_151 = arith.constant 0 : index
      %c0_152 = arith.constant 0 : index
      %210 = vector.load %arg6[%c0_149, %c0_150, %c0_151, %c0_152] : memref<1x14x4x128xf32, #tpu.memory_space<vmem>>, vector<1x14x4x128xf32>
      tpu.vector_store %arg6[%c0_149, %c0_150, %c0_151, %c0_152], %209 {strides = array<i32>} : memref<1x14x4x128xf32, #tpu.memory_space<vmem>>, vector<1x14x4x128xf32>,
    } else {
    }
    %c0 = arith.constant 0 : index
    %c0_1 = arith.constant 0 : index
    %3 = vector.load %arg2[%c0, %c0_1] : memref<4x128xf32, #tpu.memory_space<vmem>>, vector<4x128xf32>
    %c0_2 = arith.constant 0 : index
    %c0_3 = arith.constant 0 : index
    %4 = vector.load %arg3[%c0_2, %c0_3] : memref<4x128xf32, #tpu.memory_space<vmem>>, vector<4x128xf32>
    %c0_4 = arith.constant 0 : index
    %c0_5 = arith.constant 0 : index
    %5 = vector.load %arg4[%c0_4, %c0_5] : memref<4x128xf32, #tpu.memory_space<vmem>>, vector<4x128xf32>
    %c0_6 = arith.constant 0 : index
    %c0_7 = arith.constant 0 : index
    %6 = vector.load %arg5[%c0_6, %c0_7] : memref<4x128xf32, #tpu.memory_space<vmem>>, vector<4x128xf32>
    %7 = arith.negf %3 : vector<4x128xf32>
    %8 = math.exp %7 : vector<4x128xf32>
    %cst = arith.constant 1.000000e+00 : f32
    %9 = vector.broadcast %cst : f32 to vector<4x128xf32>
    %10 = arith.addf %9, %8 : vector<4x128xf32>
    %11 = arith.divf %9, %10 : vector<4x128xf32>
    %cst_8 = arith.constant 0.000000e+00 : f32
    %12 = vector.broadcast %cst_8 : f32 to vector<4x128xf32>
    %13 = arith.cmpf oge, %3, %12 : vector<4x128xf32>
    %cst_9 = arith.constant 1.000000e+00 : f32
    %14 = vector.broadcast %cst_9 : f32 to vector<4x128xf32>
    %15 = arith.subf %14, %11 : vector<4x128xf32>
    %16 = arith.select %13, %11, %15 : vector<4x128xi1>, vector<4x128xf32>
    %cst_10 = arith.constant 1.000000e-30 : f32
    %17 = vector.broadcast %cst_10 : f32 to vector<4x128xf32>
    %18 = arith.maximumf %16, %17 : vector<4x128xf32>
    %19 = math.log %18 : vector<4x128xf32>
    %cst_11 = arith.constant 0.000000e+00 : f32
    %20 = vector.broadcast %cst_11 : f32 to vector<4x128xf32>
    %21 = arith.subf %20, %19 : vector<4x128xf32>
    %cst_12 = arith.constant 0.000000e+00 : f32
    %22 = vector.broadcast %cst_12 : f32 to vector<4x128xf32>
    %23 = arith.maximumf %3, %22 : vector<4x128xf32>
    %24 = arith.mulf %3, %4 : vector<4x128xf32>
    %25 = arith.subf %23, %24 : vector<4x128xf32>
    %26 = arith.addf %25, %21 : vector<4x128xf32>
    %c0_13 = arith.constant 0 : index
    %c0_14 = arith.constant 0 : index
    %c0_15 = arith.constant 0 : index
    %c0_16 = arith.constant 0 : index
    %27 = vector.load %arg6[%c0_13, %c0_14, %c0_15, %c0_16] : memref<1x14x4x128xf32, #tpu.memory_space<vmem>>, vector<1x1x4x128xf32>
    %28 = vector.shape_cast %27 : vector<1x1x4x128xf32> to vector<4x128xf32>
    %29 = vector.shape_cast %26 : vector<4x128xf32> to vector<1x4x128xf32>
    %cst_17 = arith.constant dense<0.000000e+00> : vector<4x128xf32>
    %30 = vector.multi_reduction <add>, %29, %cst_17 [0] : vector<1x4x128xf32> to vector<4x128xf32>
    %31 = arith.addf %28, %30 : vector<4x128xf32>
    %c0_18 = arith.constant 0 : index
    %c0_19 = arith.constant 0 : index
    %c0_20 = arith.constant 0 : index
    %c0_21 = arith.constant 0 : index
    %32 = vector.load %arg6[%c0_18, %c0_19, %c0_20, %c0_21] : memref<1x14x4x128xf32, #tpu.memory_space<vmem>>, vector<1x1x4x128xf32>
    %33 = vector.shape_cast %32 : vector<1x1x4x128xf32> to vector<4x128xf32>
    %34 = vector.shape_cast %31 : vector<4x128xf32> to vector<1x1x4x128xf32>
    tpu.vector_store %arg6[%c0_18, %c0_19, %c0_20, %c0_21], %34 {strides = array<i32>} : memref<1x14x4x128xf32, #tpu.memory_space<vmem>>, vector<1x1x4x128xf32>,
    %cst_22 = arith.constant 2.550000e+02 : f32
    %35 = vector.broadcast %cst_22 : f32 to vector<4x128xf32>
    %36 = arith.cmpf one, %4, %35 : vector<4x128xf32>
    %37 = arith.extui %36 : vector<4x128xi1> to vector<4x128xi32>
    %38 = arith.sitofp %37 : vector<4x128xi32> to vector<4x128xf32>
    %cst_23 = arith.constant 9.99999997E-7 : f32
    %cst_24 = arith.constant 0.999998986 : f32
    %39 = vector.broadcast %cst_23 : f32 to vector<4x128xf32>
    %40 = arith.maximumf %39, %3 : vector<4x128xf32>
    %41 = vector.broadcast %cst_24 : f32 to vector<4x128xf32>
    %42 = arith.minimumf %41, %40 : vector<4x128xf32>
    %cst_25 = arith.constant 9.99999997E-7 : f32
    %cst_26 = arith.constant 0.999998986 : f32
    %43 = vector.broadcast %cst_25 : f32 to vector<4x128xf32>
    %44 = arith.maximumf %43, %4 : vector<4x128xf32>
    %45 = vector.broadcast %cst_26 : f32 to vector<4x128xf32>
    %46 = arith.minimumf %45, %44 : vector<4x128xf32>
    %cst_27 = arith.constant 1.000000e+00 : f32
    %47 = vector.broadcast %cst_27 : f32 to vector<4x128xf32>
    %48 = arith.subf %47, %46 : vector<4x128xf32>
    %cst_28 = arith.constant 1.000000e+00 : f32
    %49 = vector.broadcast %cst_28 : f32 to vector<4x128xf32>
    %50 = arith.subf %49, %42 : vector<4x128xf32>
    %51 = arith.mulf %48, %50 : vector<4x128xf32>
    %52 = arith.mulf %46, %42 : vector<4x128xf32>
    %53 = arith.addf %51, %52 : vector<4x128xf32>
    %cst_29 = arith.constant 1.000000e+00 : f32
    %54 = vector.broadcast %cst_29 : f32 to vector<4x128xf32>
    %55 = arith.subf %54, %53 : vector<4x128xf32>
    %cst_30 = arith.constant 1.000000e+00 : f32
    %56 = vector.broadcast %cst_30 : f32 to vector<4x128xf32>
    %57 = arith.subf %56, %53 : vector<4x128xf32>
    %58 = arith.mulf %55, %57 : vector<4x128xf32>
    %cst_31 = arith.constant 0.000000e+00 : f32
    %59 = vector.broadcast %cst_31 : f32 to vector<4x128xf32>
    %60 = arith.subf %59, %58 : vector<4x128xf32>
    %61 = math.log %53 : vector<4x128xf32>
    %62 = arith.mulf %60, %61 : vector<4x128xf32>
    %c0_32 = arith.constant 0 : index
    %c1 = arith.constant 1 : index
    %c0_33 = arith.constant 0 : index
    %c0_34 = arith.constant 0 : index
    %63 = vector.load %arg6[%c0_32, %c1, %c0_33, %c0_34] : memref<1x14x4x128xf32, #tpu.memory_space<vmem>>, vector<1x1x4x128xf32>
    %64 = vector.shape_cast %63 : vector<1x1x4x128xf32> to vector<4x128xf32>
    %65 = arith.mulf %62, %38 : vector<4x128xf32>
    %66 = vector.shape_cast %65 : vector<4x128xf32> to vector<1x4x128xf32>
    %cst_35 = arith.constant dense<0.000000e+00> : vector<4x128xf32>
    %67 = vector.multi_reduction <add>, %66, %cst_35 [0] : vector<1x4x128xf32> to vector<4x128xf32>
    %68 = arith.addf %64, %67 : vector<4x128xf32>
    %c0_36 = arith.constant 0 : index
    %c1_37 = arith.constant 1 : index
    %c0_38 = arith.constant 0 : index
    %c0_39 = arith.constant 0 : index
    %69 = vector.load %arg6[%c0_36, %c1_37, %c0_38, %c0_39] : memref<1x14x4x128xf32, #tpu.memory_space<vmem>>, vector<1x1x4x128xf32>
    %70 = vector.shape_cast %69 : vector<1x1x4x128xf32> to vector<4x128xf32>
    %71 = vector.shape_cast %68 : vector<4x128xf32> to vector<1x1x4x128xf32>
    tpu.vector_store %arg6[%c0_36, %c1_37, %c0_38, %c0_39], %71 {strides = array<i32>} : memref<1x14x4x128xf32, #tpu.memory_space<vmem>>, vector<1x1x4x128xf32>,
    %c0_40 = arith.constant 0 : index
    %c2 = arith.constant 2 : index
    %c0_41 = arith.constant 0 : index
    %c0_42 = arith.constant 0 : index
    %72 = vector.load %arg6[%c0_40, %c2, %c0_41, %c0_42] : memref<1x14x4x128xf32, #tpu.memory_space<vmem>>, vector<1x1x4x128xf32>
    %73 = vector.shape_cast %72 : vector<1x1x4x128xf32> to vector<4x128xf32>
    %74 = vector.shape_cast %38 : vector<4x128xf32> to vector<1x4x128xf32>
    %cst_43 = arith.constant dense<0.000000e+00> : vector<4x128xf32>
    %75 = vector.multi_reduction <add>, %74, %cst_43 [0] : vector<1x4x128xf32> to vector<4x128xf32>
    %76 = arith.addf %73, %75 : vector<4x128xf32>
    %c0_44 = arith.constant 0 : index
    %c2_45 = arith.constant 2 : index
    %c0_46 = arith.constant 0 : index
    %c0_47 = arith.constant 0 : index
    %77 = vector.load %arg6[%c0_44, %c2_45, %c0_46, %c0_47] : memref<1x14x4x128xf32, #tpu.memory_space<vmem>>, vector<1x1x4x128xf32>
    %78 = vector.shape_cast %77 : vector<1x1x4x128xf32> to vector<4x128xf32>
    %79 = vector.shape_cast %76 : vector<4x128xf32> to vector<1x1x4x128xf32>
    tpu.vector_store %arg6[%c0_44, %c2_45, %c0_46, %c0_47], %79 {strides = array<i32>} : memref<1x14x4x128xf32, #tpu.memory_space<vmem>>, vector<1x1x4x128xf32>,
    %cst_48 = arith.constant 1.000000e+00 : f32
    %80 = vector.broadcast %cst_48 : f32 to vector<4x128xf32>
    %81 = arith.cmpf oeq, %4, %80 : vector<4x128xf32>
    %82 = arith.extui %81 : vector<4x128xi1> to vector<4x128xi32>
    %83 = arith.sitofp %82 : vector<4x128xi32> to vector<4x128xf32>
    %c0_49 = arith.constant 0 : index
    %c3 = arith.constant 3 : index
    %c0_50 = arith.constant 0 : index
    %c0_51 = arith.constant 0 : index
    %84 = vector.load %arg6[%c0_49, %c3, %c0_50, %c0_51] : memref<1x14x4x128xf32, #tpu.memory_space<vmem>>, vector<1x1x4x128xf32>
    %85 = vector.shape_cast %84 : vector<1x1x4x128xf32> to vector<4x128xf32>
    %86 = arith.mulf %11, %83 : vector<4x128xf32>
    %87 = vector.shape_cast %86 : vector<4x128xf32> to vector<1x4x128xf32>
    %cst_52 = arith.constant dense<0.000000e+00> : vector<4x128xf32>
    %88 = vector.multi_reduction <add>, %87, %cst_52 [0] : vector<1x4x128xf32> to vector<4x128xf32>
    %89 = arith.addf %85, %88 : vector<4x128xf32>
    %c0_53 = arith.constant 0 : index
    %c3_54 = arith.constant 3 : index
    %c0_55 = arith.constant 0 : index
    %c0_56 = arith.constant 0 : index
    %90 = vector.load %arg6[%c0_53, %c3_54, %c0_55, %c0_56] : memref<1x14x4x128xf32, #tpu.memory_space<vmem>>, vector<1x1x4x128xf32>
    %91 = vector.shape_cast %90 : vector<1x1x4x128xf32> to vector<4x128xf32>
    %92 = vector.shape_cast %89 : vector<4x128xf32> to vector<1x1x4x128xf32>
    tpu.vector_store %arg6[%c0_53, %c3_54, %c0_55, %c0_56], %92 {strides = array<i32>} : memref<1x14x4x128xf32, #tpu.memory_space<vmem>>, vector<1x1x4x128xf32>,
    %c0_57 = arith.constant 0 : index
    %c4 = arith.constant 4 : index
    %c0_58 = arith.constant 0 : index
    %c0_59 = arith.constant 0 : index
    %93 = vector.load %arg6[%c0_57, %c4, %c0_58, %c0_59] : memref<1x14x4x128xf32, #tpu.memory_space<vmem>>, vector<1x1x4x128xf32>
    %94 = vector.shape_cast %93 : vector<1x1x4x128xf32> to vector<4x128xf32>
    %95 = vector.shape_cast %11 : vector<4x128xf32> to vector<1x4x128xf32>
    %cst_60 = arith.constant dense<0.000000e+00> : vector<4x128xf32>
    %96 = vector.multi_reduction <add>, %95, %cst_60 [0] : vector<1x4x128xf32> to vector<4x128xf32>
    %97 = arith.addf %94, %96 : vector<4x128xf32>
    %c0_61 = arith.constant 0 : index
    %c4_62 = arith.constant 4 : index
    %c0_63 = arith.constant 0 : index
    %c0_64 = arith.constant 0 : index
    %98 = vector.load %arg6[%c0_61, %c4_62, %c0_63, %c0_64] : memref<1x14x4x128xf32, #tpu.memory_space<vmem>>, vector<1x1x4x128xf32>
    %99 = vector.shape_cast %98 : vector<1x1x4x128xf32> to vector<4x128xf32>
    %100 = vector.shape_cast %97 : vector<4x128xf32> to vector<1x1x4x128xf32>
    tpu.vector_store %arg6[%c0_61, %c4_62, %c0_63, %c0_64], %100 {strides = array<i32>} : memref<1x14x4x128xf32, #tpu.memory_space<vmem>>, vector<1x1x4x128xf32>,
    %c0_65 = arith.constant 0 : index
    %c5 = arith.constant 5 : index
    %c0_66 = arith.constant 0 : index
    %c0_67 = arith.constant 0 : index
    %101 = vector.load %arg6[%c0_65, %c5, %c0_66, %c0_67] : memref<1x14x4x128xf32, #tpu.memory_space<vmem>>, vector<1x1x4x128xf32>
    %102 = vector.shape_cast %101 : vector<1x1x4x128xf32> to vector<4x128xf32>
    %103 = vector.shape_cast %83 : vector<4x128xf32> to vector<1x4x128xf32>
    %cst_68 = arith.constant dense<0.000000e+00> : vector<4x128xf32>
    %104 = vector.multi_reduction <add>, %103, %cst_68 [0] : vector<1x4x128xf32> to vector<4x128xf32>
    %105 = arith.addf %102, %104 : vector<4x128xf32>
    %c0_69 = arith.constant 0 : index
    %c5_70 = arith.constant 5 : index
    %c0_71 = arith.constant 0 : index
    %c0_72 = arith.constant 0 : index
    %106 = vector.load %arg6[%c0_69, %c5_70, %c0_71, %c0_72] : memref<1x14x4x128xf32, #tpu.memory_space<vmem>>, vector<1x1x4x128xf32>
    %107 = vector.shape_cast %106 : vector<1x1x4x128xf32> to vector<4x128xf32>
    %108 = vector.shape_cast %105 : vector<4x128xf32> to vector<1x1x4x128xf32>
    tpu.vector_store %arg6[%c0_69, %c5_70, %c0_71, %c0_72], %108 {strides = array<i32>} : memref<1x14x4x128xf32, #tpu.memory_space<vmem>>, vector<1x1x4x128xf32>,
    %c0_73 = arith.constant 0 : index
    %c6 = arith.constant 6 : index
    %c0_74 = arith.constant 0 : index
    %c0_75 = arith.constant 0 : index
    %109 = vector.load %arg6[%c0_73, %c6, %c0_74, %c0_75] : memref<1x14x4x128xf32, #tpu.memory_space<vmem>>, vector<1x1x4x128xf32>
    %110 = vector.shape_cast %109 : vector<1x1x4x128xf32> to vector<4x128xf32>
    %111 = arith.mulf %3, %4 : vector<4x128xf32>
    %112 = vector.shape_cast %111 : vector<4x128xf32> to vector<1x4x128xf32>
    %cst_76 = arith.constant dense<0.000000e+00> : vector<4x128xf32>
    %113 = vector.multi_reduction <add>, %112, %cst_76 [0] : vector<1x4x128xf32> to vector<4x128xf32>
    %114 = arith.addf %110, %113 : vector<4x128xf32>
    %c0_77 = arith.constant 0 : index
    %c6_78 = arith.constant 6 : index
    %c0_79 = arith.constant 0 : index
    %c0_80 = arith.constant 0 : index
    %115 = vector.load %arg6[%c0_77, %c6_78, %c0_79, %c0_80] : memref<1x14x4x128xf32, #tpu.memory_space<vmem>>, vector<1x1x4x128xf32>
    %116 = vector.shape_cast %115 : vector<1x1x4x128xf32> to vector<4x128xf32>
    %117 = vector.shape_cast %114 : vector<4x128xf32> to vector<1x1x4x128xf32>
    tpu.vector_store %arg6[%c0_77, %c6_78, %c0_79, %c0_80], %117 {strides = array<i32>} : memref<1x14x4x128xf32, #tpu.memory_space<vmem>>, vector<1x1x4x128xf32>,
    %c0_81 = arith.constant 0 : index
    %c7 = arith.constant 7 : index
    %c0_82 = arith.constant 0 : index
    %c0_83 = arith.constant 0 : index
    %118 = vector.load %arg6[%c0_81, %c7, %c0_82, %c0_83] : memref<1x14x4x128xf32, #tpu.memory_space<vmem>>, vector<1x1x4x128xf32>
    %119 = vector.shape_cast %118 : vector<1x1x4x128xf32> to vector<4x128xf32>
    %120 = vector.shape_cast %3 : vector<4x128xf32> to vector<1x4x128xf32>
    %cst_84 = arith.constant dense<0.000000e+00> : vector<4x128xf32>
    %121 = vector.multi_reduction <add>, %120, %cst_84 [0] : vector<1x4x128xf32> to vector<4x128xf32>
    %122 = arith.addf %119, %121 : vector<4x128xf32>
    %c0_85 = arith.constant 0 : index
    %c7_86 = arith.constant 7 : index
    %c0_87 = arith.constant 0 : index
    %c0_88 = arith.constant 0 : index
    %123 = vector.load %arg6[%c0_85, %c7_86, %c0_87, %c0_88] : memref<1x14x4x128xf32, #tpu.memory_space<vmem>>, vector<1x1x4x128xf32>
    %124 = vector.shape_cast %123 : vector<1x1x4x128xf32> to vector<4x128xf32>
    %125 = vector.shape_cast %122 : vector<4x128xf32> to vector<1x1x4x128xf32>
    tpu.vector_store %arg6[%c0_85, %c7_86, %c0_87, %c0_88], %125 {strides = array<i32>} : memref<1x14x4x128xf32, #tpu.memory_space<vmem>>, vector<1x1x4x128xf32>,
    %c0_89 = arith.constant 0 : index
    %c8 = arith.constant 8 : index
    %c0_90 = arith.constant 0 : index
    %c0_91 = arith.constant 0 : index
    %126 = vector.load %arg6[%c0_89, %c8, %c0_90, %c0_91] : memref<1x14x4x128xf32, #tpu.memory_space<vmem>>, vector<1x1x4x128xf32>
    %127 = vector.shape_cast %126 : vector<1x1x4x128xf32> to vector<4x128xf32>
    %128 = vector.shape_cast %4 : vector<4x128xf32> to vector<1x4x128xf32>
    %cst_92 = arith.constant dense<0.000000e+00> : vector<4x128xf32>
    %129 = vector.multi_reduction <add>, %128, %cst_92 [0] : vector<1x4x128xf32> to vector<4x128xf32>
    %130 = arith.addf %127, %129 : vector<4x128xf32>
    %c0_93 = arith.constant 0 : index
    %c8_94 = arith.constant 8 : index
    %c0_95 = arith.constant 0 : index
    %c0_96 = arith.constant 0 : index
    %131 = vector.load %arg6[%c0_93, %c8_94, %c0_95, %c0_96] : memref<1x14x4x128xf32, #tpu.memory_space<vmem>>, vector<1x1x4x128xf32>
    %132 = vector.shape_cast %131 : vector<1x1x4x128xf32> to vector<4x128xf32>
    %133 = vector.shape_cast %130 : vector<4x128xf32> to vector<1x1x4x128xf32>
    tpu.vector_store %arg6[%c0_93, %c8_94, %c0_95, %c0_96], %133 {strides = array<i32>} : memref<1x14x4x128xf32, #tpu.memory_space<vmem>>, vector<1x1x4x128xf32>,
    %134 = arith.negf %5 : vector<4x128xf32>
    %135 = math.exp %134 : vector<4x128xf32>
    %cst_97 = arith.constant 1.000000e+00 : f32
    %136 = vector.broadcast %cst_97 : f32 to vector<4x128xf32>
    %137 = arith.addf %136, %135 : vector<4x128xf32>
    %138 = arith.divf %136, %137 : vector<4x128xf32>
    %c0_98 = arith.constant 0 : index
    %c9 = arith.constant 9 : index
    %c0_99 = arith.constant 0 : index
    %c0_100 = arith.constant 0 : index
    %139 = vector.load %arg6[%c0_98, %c9, %c0_99, %c0_100] : memref<1x14x4x128xf32, #tpu.memory_space<vmem>>, vector<1x1x4x128xf32>
    %140 = vector.shape_cast %139 : vector<1x1x4x128xf32> to vector<4x128xf32>
    %141 = arith.mulf %138, %6 : vector<4x128xf32>
    %142 = vector.shape_cast %141 : vector<4x128xf32> to vector<1x4x128xf32>
    %cst_101 = arith.constant dense<0.000000e+00> : vector<4x128xf32>
    %143 = vector.multi_reduction <add>, %142, %cst_101 [0] : vector<1x4x128xf32> to vector<4x128xf32>
    %144 = arith.addf %140, %143 : vector<4x128xf32>
    %c0_102 = arith.constant 0 : index
    %c9_103 = arith.constant 9 : index
    %c0_104 = arith.constant 0 : index
    %c0_105 = arith.constant 0 : index
    %145 = vector.load %arg6[%c0_102, %c9_103, %c0_104, %c0_105] : memref<1x14x4x128xf32, #tpu.memory_space<vmem>>, vector<1x1x4x128xf32>
    %146 = vector.shape_cast %145 : vector<1x1x4x128xf32> to vector<4x128xf32>
    %147 = vector.shape_cast %144 : vector<4x128xf32> to vector<1x1x4x128xf32>
    tpu.vector_store %arg6[%c0_102, %c9_103, %c0_104, %c0_105], %147 {strides = array<i32>} : memref<1x14x4x128xf32, #tpu.memory_space<vmem>>, vector<1x1x4x128xf32>,
    %c0_106 = arith.constant 0 : index
    %c10 = arith.constant 10 : index
    %c0_107 = arith.constant 0 : index
    %c0_108 = arith.constant 0 : index
    %148 = vector.load %arg6[%c0_106, %c10, %c0_107, %c0_108] : memref<1x14x4x128xf32, #tpu.memory_space<vmem>>, vector<1x1x4x128xf32>
    %149 = vector.shape_cast %148 : vector<1x1x4x128xf32> to vector<4x128xf32>
    %150 = vector.shape_cast %138 : vector<4x128xf32> to vector<1x4x128xf32>
    %cst_109 = arith.constant dense<0.000000e+00> : vector<4x128xf32>
    %151 = vector.multi_reduction <add>, %150, %cst_109 [0] : vector<1x4x128xf32> to vector<4x128xf32>
    %152 = arith.addf %149, %151 : vector<4x128xf32>
    %c0_110 = arith.constant 0 : index
    %c10_111 = arith.constant 10 : index
    %c0_112 = arith.constant 0 : index
    %c0_113 = arith.constant 0 : index
    %153 = vector.load %arg6[%c0_110, %c10_111, %c0_112, %c0_113] : memref<1x14x4x128xf32, #tpu.memory_space<vmem>>, vector<1x1x4x128xf32>
    %154 = vector.shape_cast %153 : vector<1x1x4x128xf32> to vector<4x128xf32>
    %155 = vector.shape_cast %152 : vector<4x128xf32> to vector<1x1x4x128xf32>
    tpu.vector_store %arg6[%c0_110, %c10_111, %c0_112, %c0_113], %155 {strides = array<i32>} : memref<1x14x4x128xf32, #tpu.memory_space<vmem>>, vector<1x1x4x128xf32>,
    %c0_114 = arith.constant 0 : index
    %c11 = arith.constant 11 : index
    %c0_115 = arith.constant 0 : index
    %c0_116 = arith.constant 0 : index
    %156 = vector.load %arg6[%c0_114, %c11, %c0_115, %c0_116] : memref<1x14x4x128xf32, #tpu.memory_space<vmem>>, vector<1x1x4x128xf32>
    %157 = vector.shape_cast %156 : vector<1x1x4x128xf32> to vector<4x128xf32>
    %158 = vector.shape_cast %6 : vector<4x128xf32> to vector<1x4x128xf32>
    %cst_117 = arith.constant dense<0.000000e+00> : vector<4x128xf32>
    %159 = vector.multi_reduction <add>, %158, %cst_117 [0] : vector<1x4x128xf32> to vector<4x128xf32>
    %160 = arith.addf %157, %159 : vector<4x128xf32>
    %c0_118 = arith.constant 0 : index
    %c11_119 = arith.constant 11 : index
    %c0_120 = arith.constant 0 : index
    %c0_121 = arith.constant 0 : index
    %161 = vector.load %arg6[%c0_118, %c11_119, %c0_120, %c0_121] : memref<1x14x4x128xf32, #tpu.memory_space<vmem>>, vector<1x1x4x128xf32>
    %162 = vector.shape_cast %161 : vector<1x1x4x128xf32> to vector<4x128xf32>
    %163 = vector.shape_cast %160 : vector<4x128xf32> to vector<1x1x4x128xf32>
    tpu.vector_store %arg6[%c0_118, %c11_119, %c0_120, %c0_121], %163 {strides = array<i32>} : memref<1x14x4x128xf32, #tpu.memory_space<vmem>>, vector<1x1x4x128xf32>,
    %cst_122 = arith.constant 2.550000e+02 : f32
    %164 = vector.broadcast %cst_122 : f32 to vector<4x128xf32>
    %165 = arith.cmpf one, %6, %164 : vector<4x128xf32>
    %166 = arith.extui %165 : vector<4x128xi1> to vector<4x128xi32>
    %167 = arith.sitofp %166 : vector<4x128xi32> to vector<4x128xf32>
    %cst_123 = arith.constant 9.99999997E-7 : f32
    %cst_124 = arith.constant 0.999998986 : f32
    %168 = vector.broadcast %cst_123 : f32 to vector<4x128xf32>
    %169 = arith.maximumf %168, %138 : vector<4x128xf32>
    %170 = vector.broadcast %cst_124 : f32 to vector<4x128xf32>
    %171 = arith.minimumf %170, %169 : vector<4x128xf32>
    %cst_125 = arith.constant 9.99999997E-7 : f32
    %cst_126 = arith.constant 0.999998986 : f32
    %172 = vector.broadcast %cst_125 : f32 to vector<4x128xf32>
    %173 = arith.maximumf %172, %6 : vector<4x128xf32>
    %174 = vector.broadcast %cst_126 : f32 to vector<4x128xf32>
    %175 = arith.minimumf %174, %173 : vector<4x128xf32>
    %cst_127 = arith.constant 1.000000e+00 : f32
    %176 = vector.broadcast %cst_127 : f32 to vector<4x128xf32>
    %177 = arith.subf %176, %175 : vector<4x128xf32>
    %cst_128 = arith.constant 1.000000e+00 : f32
    %178 = vector.broadcast %cst_128 : f32 to vector<4x128xf32>
    %179 = arith.subf %178, %171 : vector<4x128xf32>
    %180 = arith.mulf %177, %179 : vector<4x128xf32>
    %181 = arith.mulf %175, %171 : vector<4x128xf32>
    %182 = arith.addf %180, %181 : vector<4x128xf32>
    %cst_129 = arith.constant 1.000000e+00 : f32
    %183 = vector.broadcast %cst_129 : f32 to vector<4x128xf32>
    %184 = arith.subf %183, %182 : vector<4x128xf32>
    %cst_130 = arith.constant 1.000000e+00 : f32
    %185 = vector.broadcast %cst_130 : f32 to vector<4x128xf32>
    %186 = arith.subf %185, %182 : vector<4x128xf32>
    %187 = arith.mulf %184, %186 : vector<4x128xf32>
    %cst_131 = arith.constant 0.000000e+00 : f32
    %188 = vector.broadcast %cst_131 : f32 to vector<4x128xf32>
    %189 = arith.subf %188, %187 : vector<4x128xf32>
    %190 = math.log %182 : vector<4x128xf32>
    %191 = arith.mulf %189, %190 : vector<4x128xf32>
    %c0_132 = arith.constant 0 : index
    %c12 = arith.constant 12 : index
    %c0_133 = arith.constant 0 : index
    %c0_134 = arith.constant 0 : index
    %192 = vector.load %arg6[%c0_132, %c12, %c0_133, %c0_134] : memref<1x14x4x128xf32, #tpu.memory_space<vmem>>, vector<1x1x4x128xf32>
    %193 = vector.shape_cast %192 : vector<1x1x4x128xf32> to vector<4x128xf32>
    %194 = arith.mulf %191, %167 : vector<4x128xf32>
    %195 = vector.shape_cast %194 : vector<4x128xf32> to vector<1x4x128xf32>
    %cst_135 = arith.constant dense<0.000000e+00> : vector<4x128xf32>
    %196 = vector.multi_reduction <add>, %195, %cst_135 [0] : vector<1x4x128xf32> to vector<4x128xf32>
    %197 = arith.addf %193, %196 : vector<4x128xf32>
    %c0_136 = arith.constant 0 : index
    %c12_137 = arith.constant 12 : index
    %c0_138 = arith.constant 0 : index
    %c0_139 = arith.constant 0 : index
    %198 = vector.load %arg6[%c0_136, %c12_137, %c0_138, %c0_139] : memref<1x14x4x128xf32, #tpu.memory_space<vmem>>, vector<1x1x4x128xf32>
    %199 = vector.shape_cast %198 : vector<1x1x4x128xf32> to vector<4x128xf32>
    %200 = vector.shape_cast %197 : vector<4x128xf32> to vector<1x1x4x128xf32>
    tpu.vector_store %arg6[%c0_136, %c12_137, %c0_138, %c0_139], %200 {strides = array<i32>} : memref<1x14x4x128xf32, #tpu.memory_space<vmem>>, vector<1x1x4x128xf32>,
    %c0_140 = arith.constant 0 : index
    %c13 = arith.constant 13 : index
    %c0_141 = arith.constant 0 : index
    %c0_142 = arith.constant 0 : index
    %201 = vector.load %arg6[%c0_140, %c13, %c0_141, %c0_142] : memref<1x14x4x128xf32, #tpu.memory_space<vmem>>, vector<1x1x4x128xf32>
    %202 = vector.shape_cast %201 : vector<1x1x4x128xf32> to vector<4x128xf32>
    %203 = vector.shape_cast %167 : vector<4x128xf32> to vector<1x4x128xf32>
    %cst_143 = arith.constant dense<0.000000e+00> : vector<4x128xf32>
    %204 = vector.multi_reduction <add>, %203, %cst_143 [0] : vector<1x4x128xf32> to vector<4x128xf32>
    %205 = arith.addf %202, %204 : vector<4x128xf32>
    %c0_144 = arith.constant 0 : index
    %c13_145 = arith.constant 13 : index
    %c0_146 = arith.constant 0 : index
    %c0_147 = arith.constant 0 : index
    %206 = vector.load %arg6[%c0_144, %c13_145, %c0_146, %c0_147] : memref<1x14x4x128xf32, #tpu.memory_space<vmem>>, vector<1x1x4x128xf32>
    %207 = vector.shape_cast %206 : vector<1x1x4x128xf32> to vector<4x128xf32>
    %208 = vector.shape_cast %205 : vector<4x128xf32> to vector<1x1x4x128xf32>
    tpu.vector_store %arg6[%c0_144, %c13_145, %c0_146, %c0_147], %208 {strides = array<i32>} : memref<1x14x4x128xf32, #tpu.memory_space<vmem>>, vector<1x1x4x128xf32>,
    return
  }
  func.func @transform_0(%arg0: i32, %arg1: i32) -> (i32, i32) {
    %c1_i32 = arith.constant 1 : i32
    %0 = arith.muli %arg0, %c1_i32 : i32
    %1 = arith.addi %0, %arg1 : i32
    %c0_i32 = arith.constant 0 : i32
    %c0_i32_0 = arith.constant 0 : i32
    return %1, %c0_i32 : i32, i32
  }
  func.func @transform_1(%arg0: i32, %arg1: i32) -> (i32, i32) {
    %c1_i32 = arith.constant 1 : i32
    %0 = arith.muli %arg0, %c1_i32 : i32
    %1 = arith.addi %0, %arg1 : i32
    %c0_i32 = arith.constant 0 : i32
    %c0_i32_0 = arith.constant 0 : i32
    return %1, %c0_i32 : i32, i32
  }
  func.func @transform_2(%arg0: i32, %arg1: i32) -> (i32, i32) {
    %c1_i32 = arith.constant 1 : i32
    %0 = arith.muli %arg0, %c1_i32 : i32
    %1 = arith.addi %0, %arg1 : i32
    %c0_i32 = arith.constant 0 : i32
    %c0_i32_0 = arith.constant 0 : i32
    return %1, %c0_i32 : i32, i32
  }
  func.func @transform_3(%arg0: i32, %arg1: i32) -> (i32, i32) {
    %c1_i32 = arith.constant 1 : i32
    %0 = arith.muli %arg0, %c1_i32 : i32
    %1 = arith.addi %0, %arg1 : i32
    %c0_i32 = arith.constant 0 : i32
    %c0_i32_0 = arith.constant 0 : i32
    return %1, %c0_i32 : i32, i32
  }
  func.func @transform_4(%arg0: i32, %arg1: i32) -> (i32, i32, i32, i32) {
    %c0_i32 = arith.constant 0 : i32
    %c0_i32_0 = arith.constant 0 : i32
    %c0_i32_1 = arith.constant 0 : i32
    %c0_i32_2 = arith.constant 0 : i32
    return %arg0, %c0_i32, %c0_i32_0, %c0_i32_1 : i32, i32, i32, i32
  }
}

</mosaic_0001>

<llo_original>
// kernel: tpu_custom_call.1
$region0: #{tpu_custom_call.1}
  #allocation0 [shape = 'u32[]', space=smem, size = 0x4, offset = 0x4, fixed_abs, tag = 'smem constant byte address 0x4 - core index']
  #allocation1 [shape = 'u32[72,128]{1,0:T(1,128)}', space=vmem, size = 0x9000, scoped, tag = 'internal scratch']
  %s0 = inlined_call_operand.hbm [shape: f32[4,128], index: 0, kind: input, shape index: {}]
  %s1 = inlined_call_operand.hbm [shape: f32[4,128], index: 1, kind: input, shape index: {}]
  %s2 = inlined_call_operand.hbm [shape: f32[4,128], index: 2, kind: input, shape index: {}]
  %s3 = inlined_call_operand.hbm [shape: f32[4,128], index: 3, kind: input, shape index: {}]
  %s4 = inlined_call_operand.hbm [shape: f32[1,14,4,128], index: 4, kind: output, shape index: {}]
  %s5 = sld [smem:[#allocation0]]
  $region46: #{tpu_custom_call.1} parent=0
    _
  %s7 = ssub.s32 1, %s5
  %s8 = scalar_select 0, %s7, %s5
  $region1: #{tpu_custom_call.1} parent=0
    #allocation2 [shape = 'u8[2048]{0}', space=vmem, size = 0x800, scoped, tag = 'input window, operand 0, single buffered']
    #allocation3 [shape = 's32[1]{0}', space=sflag, size = 0x4, scoped, tag = 'scoped memory for tpu_custom_call.1']
    #allocation4 [shape = 's32[1]{0}', space=sflag, size = 0x4, scoped, tag = 'scoped memory for tpu_custom_call.1']
    #allocation5 [shape = 'u8[2048]{0}', space=vmem, size = 0x800, scoped, tag = 'input window, operand 1, single buffered']
    #allocation6 [shape = 's32[1]{0}', space=sflag, size = 0x4, scoped, tag = 'scoped memory for tpu_custom_call.1']
    #allocation7 [shape = 'u8[2048]{0}', space=vmem, size = 0x800, scoped, tag = 'input window, operand 2, single buffered']
    #allocation8 [shape = 'u8[2048]{0}', space=vmem, size = 0x800, scoped, tag = 'input window, operand 3, single buffered']
    #allocation9 [shape = 's32[1]{0}', space=sflag, size = 0x4, scoped, tag = 'scoped memory for tpu_custom_call.1']
    #allocation10 [shape = 'u8[28672]{0}', space=vmem, size = 0x7000, scoped, tag = 'output window, operand 0, single buffered']
    %9 = vsyncpa [#allocation3], 0
    %10 = vsyncpa [#allocation6], 0
    %11 = vsyncpa [#allocation9], 0
    %12 = vsyncpa [#allocation4], 0
    // Predicated region
    $region2: #{tpu_custom_call.1} parent=1 // pred_check
      _
    $region3: #{tpu_custom_call.1} parent=1 // pred_check_branch
      %14 = sbr.rel (0) target = $region5
    $region4: #{tpu_custom_call.1} parent=1 // pred_region
      %s15 = sadd.s32 0, 0
      %17 = vsyncadd [#allocation3], 0
      %s18 = smul.addr %s15, 4
      %s19 = scalar_lea.hbm %s0, %s18
      %s21 = sshll.u32 %s19, 4
      %s22 = int_to_ptr.hbm [resolvable:$true] %s21
      %s23 = sshll.u32 [#allocation2], 4
      %s24 = int_to_ptr.vmem [resolvable:$true] %s23
      %26 = dma.hbm_to_vmem [thread:$0]  %s22, 64, %s24, [#allocation3]
    $region5: #{tpu_custom_call.1} parent=1 // pred_fallthru
      _
    // Predicated region
    $region6: #{tpu_custom_call.1} parent=1 // pred_check
      _
    $region7: #{tpu_custom_call.1} parent=1 // pred_check_branch
      %28 = sbr.rel (0) target = $region9
    $region8: #{tpu_custom_call.1} parent=1 // pred_region
      %s29 = sadd.s32 0, 0
      %31 = vsyncadd [#allocation6], 0
      %s32 = smul.addr %s29, 4
      %s33 = scalar_lea.hbm %s1, %s32
      %s35 = sshll.u32 %s33, 4
      %s36 = int_to_ptr.hbm [resolvable:$true] %s35
      %s37 = sshll.u32 [#allocation5], 4
      %s38 = int_to_ptr.vmem [resolvable:$true] %s37
      %40 = dma.hbm_to_vmem [thread:$0]  %s36, 64, %s38, [#allocation6]
    $region9: #{tpu_custom_call.1} parent=1 // pred_fallthru
      _
    // Predicated region
    $region10: #{tpu_custom_call.1} parent=1 // pred_check
      _
    $region11: #{tpu_custom_call.1} parent=1 // pred_check_branch
      %42 = sbr.rel (0) target = $region13
    $region12: #{tpu_custom_call.1} parent=1 // pred_region
      %s43 = sadd.s32 0, 0
      %45 = vsyncadd [#allocation6], 0
      %s46 = smul.addr %s43, 4
      %s47 = scalar_lea.hbm %s2, %s46
      %s49 = sshll.u32 %s47, 4
      %s50 = int_to_ptr.hbm [resolvable:$true] %s49
      %s51 = sshll.u32 [#allocation7], 4
      %s52 = int_to_ptr.vmem [resolvable:$true] %s51
      %54 = dma.hbm_to_vmem [thread:$0]  %s50, 64, %s52, [#allocation6]
    $region13: #{tpu_custom_call.1} parent=1 // pred_fallthru
      _
    // Predicated region
    $region14: #{tpu_custom_call.1} parent=1 // pred_check
      _
    $region15: #{tpu_custom_call.1} parent=1 // pred_check_branch
      %56 = sbr.rel (0) target = $region17
    $region16: #{tpu_custom_call.1} parent=1 // pred_region
      %s57 = sadd.s32 0, 0
      %59 = vsyncadd [#allocation9], 0
      %s60 = smul.addr %s57, 4
      %s61 = scalar_lea.hbm %s3, %s60
      %s63 = sshll.u32 %s61, 4
      %s64 = int_to_ptr.hbm [resolvable:$true] %s63
      %s65 = sshll.u32 [#allocation8], 4
      %s66 = int_to_ptr.vmem [resolvable:$true] %s65
      %68 = dma.hbm_to_vmem [thread:$0]  %s64, 64, %s66, [#allocation9]
    $region17: #{tpu_custom_call.1} parent=1 // pred_fallthru
      _
    // Predicated region
    $region18: #{tpu_custom_call.1} parent=1 // pred_check
      _
    $region19: #{tpu_custom_call.1} parent=1 // pred_check_branch
      %70 = sbr.rel (0) target = $region21
    $region20: #{tpu_custom_call.1} parent=1 // pred_region
      %72 = dma.done [#allocation3], 64
    $region21: #{tpu_custom_call.1} parent=1 // pred_fallthru
      _
    // Predicated region
    $region22: #{tpu_custom_call.1} parent=1 // pred_check
      _
    $region23: #{tpu_custom_call.1} parent=1 // pred_check_branch
      %74 = sbr.rel (0) target = $region25
    $region24: #{tpu_custom_call.1} parent=1 // pred_region
      %76 = dma.done [#allocation6], 64
    $region25: #{tpu_custom_call.1} parent=1 // pred_fallthru
      _
    // Predicated region
    $region26: #{tpu_custom_call.1} parent=1 // pred_check
      _
    $region27: #{tpu_custom_call.1} parent=1 // pred_check_branch
      %78 = sbr.rel (0) target = $region29
    $region28: #{tpu_custom_call.1} parent=1 // pred_region
      %80 = dma.done [#allocation6], 64
    $region29: #{tpu_custom_call.1} parent=1 // pred_fallthru
      _
    // Predicated region
    $region30: #{tpu_custom_call.1} parent=1 // pred_check
      _
    $region31: #{tpu_custom_call.1} parent=1 // pred_check_branch
      %82 = sbr.rel (0) target = $region33
    $region32: #{tpu_custom_call.1} parent=1 // pred_region
      %84 = dma.done [#allocation9], 64
    $region33: #{tpu_custom_call.1} parent=1 // pred_fallthru
      _
    %s85 = sadd.s32 0, 0
    %s86 = sadd.s32 0, 0
    %s87 = sadd.s32 0, 0
    %s88 = sadd.s32 0, 0
    %p89 = scmp.eq.s32.totalorder 0, 0
    // Predicated region
    $region34: #{tpu_custom_call.1} parent=1 // pred_check
      %p90 = pneg %p89
    $region35: #{tpu_custom_call.1} parent=1 // pred_check_branch
      %92 = sbr.rel (%p90) target = $region37
    $region36: #{tpu_custom_call.1} parent=1 // pred_region
      %93 = vst [vmem:[#allocation10] sm:$0xf] 0.0
      %94 = vst [vmem:[#allocation10 + $0x4] sm:$0xf] 0.0
      %95 = vst [vmem:[#allocation10 + $0x8] sm:$0xf] 0.0
      %96 = vst [vmem:[#allocation10 + $0xc] sm:$0xf] 0.0
      %97 = vst [vmem:[#allocation10 + $0x10] sm:$0xf] 0.0
      %98 = vst [vmem:[#allocation10 + $0x14] sm:$0xf] 0.0
      %99 = vst [vmem:[#allocation10 + $0x18] sm:$0xf] 0.0
      %100 = vst [vmem:[#allocation10 + $0x1c] sm:$0xf] 0.0
      %101 = vst [vmem:[#allocation10 + $0x20] sm:$0xf] 0.0
      %102 = vst [vmem:[#allocation10 + $0x24] sm:$0xf] 0.0
      %103 = vst [vmem:[#allocation10 + $0x28] sm:$0xf] 0.0
      %104 = vst [vmem:[#allocation10 + $0x2c] sm:$0xf] 0.0
      %105 = vst [vmem:[#allocation10 + $0x30] sm:$0xf] 0.0
      %106 = vst [vmem:[#allocation10 + $0x34] sm:$0xf] 0.0
    $region37: #{tpu_custom_call.1} parent=1 // pred_fallthru
      _
    %v107 = vld [vmem:[#allocation2] sm:$0xf]
    %v108 = vld [vmem:[#allocation5] sm:$0xf]
    %v109 = vld [vmem:[#allocation7] sm:$0xf]
    %v110 = vld [vmem:[#allocation8] sm:$0xf]
    %v111 = vxor.u32 %v107, 2147483648
    %v112 = vmul.f32 %v111, 1.442695
    %v113 = vpow.pop %v112
    %v114 = vadd.f32 %v113, 1.0
    %v115 = vrcp.pop %v114
    %v116 = vmul.f32 %v114, %v115
    %v117 = vsub.f32 1.0, %v116
    %v118 = vmul.f32 %v115, %v117
    %v119 = vadd.f32 %v115, %v118
    %vm120 = vweird.f32 %v114
    %vm121 = vweird.f32 %v115
    %vm122 = vmor %vm120, %vm121
    %v123 = vsel %vm122, %v115, %v119
    %v124 = vand.u32 2147483647, %v114
    %vm125 = vcmp.eq.f32.partialorder %v124, 8.507059e+37
    %v126 = vand.u32 %v114, 2147483648
    %v127 = vor.u32 1.1754944e-38, %v126
    %v128 = vsel %vm125, %v127, %v123
    %v129 = vmul.f32 1.0, %v128
    %vm130 = vcmp.ge.f32.partialorder %v107, 0.0
    %v131 = vsub.f32 1.0, %v129
    %v132 = vsel %vm130, %v129, %v131
    %v133 = vmax.f32 %v132, 1e-30
    %v134 = vlog2.pop %v133
    %v135 = vmul.f32 %v134, 0.6931472
    %v136 = vsub.f32 0.0, %v135
    %v137 = vmax.f32 %v107, 0.0
    %v138 = vmul.f32 %v107, %v108
    %v139 = vsub.f32 %v137, %v138
    %v140 = vadd.f32 %v139, %v136
    %v141 = vld [vmem:[#allocation10] sm:$0xf]
    %v142 = vadd.f32 %v140, 0.0
    %v143 = vadd.f32 %v141, %v142
    %144 = vst [vmem:[#allocation10] sm:$0xf] %v143
    %vm145 = vcmp.ne.f32.partialorder %v108, 255.0
    %v146 = vsel %vm145, 1, 0
    %v147 = vcvt.s32.f32 %v146
    %v148 = vmax.f32 %v107, 1e-06
    %v149 = vmin.f32 %v148, 0.999999
    %v150 = vmax.f32 %v108, 1e-06
    %v151 = vmin.f32 %v150, 0.999999
    %v152 = vsub.f32 1.0, %v151
    %v153 = vsub.f32 1.0, %v149
    %v154 = vmul.f32 %v152, %v153
    %v155 = vmul.f32 %v151, %v149
    %v156 = vadd.f32 %v154, %v155
    %v157 = vsub.f32 1.0, %v156
    %v158 = vmul.f32 %v157, %v157
    %v159 = vsub.f32 0.0, %v158
    %v160 = vlog2.pop %v156
    %v161 = vmul.f32 %v160, 0.6931472
    %v162 = vmul.f32 %v159, %v161
    %s163 = scalar_lea.vmem [#allocation10], 4
    %v164 = vld [vmem:[%s163] sm:$0xf]
    %v165 = vmul.f32 %v162, %v147
    %v166 = vadd.f32 %v165, 0.0
    %v167 = vadd.f32 %v164, %v166
    %168 = vst [vmem:[%s163] sm:$0xf] %v167
    %s169 = scalar_lea.vmem [#allocation10], 8
    %v170 = vld [vmem:[%s169] sm:$0xf]
    %v171 = vadd.f32 %v147, 0.0
    %v172 = vadd.f32 %v170, %v171
    %173 = vst [vmem:[%s169] sm:$0xf] %v172
    %vm174 = vcmp.eq.f32.partialorder %v108, 1.0
    %v175 = vsel %vm174, 1, 0
    %v176 = vcvt.s32.f32 %v175
    %s177 = scalar_lea.vmem [#allocation10], 12
    %v178 = vld [vmem:[%s177] sm:$0xf]
    %v179 = vmul.f32 %v129, %v176
    %v180 = vadd.f32 %v179, 0.0
    %v181 = vadd.f32 %v178, %v180
    %182 = vst [vmem:[%s177] sm:$0xf] %v181
    %s183 = scalar_lea.vmem [#allocation10], 16
    %v184 = vld [vmem:[%s183] sm:$0xf]
    %v185 = vadd.f32 %v129, 0.0
    %v186 = vadd.f32 %v184, %v185
    %187 = vst [vmem:[%s183] sm:$0xf] %v186
    %s188 = scalar_lea.vmem [#allocation10], 20
    %v189 = vld [vmem:[%s188] sm:$0xf]
    %v190 = vadd.f32 %v176, 0.0
    %v191 = vadd.f32 %v189, %v190
    %192 = vst [vmem:[%s188] sm:$0xf] %v191
    %s193 = scalar_lea.vmem [#allocation10], 24
    %v194 = vld [vmem:[%s193] sm:$0xf]
    %v195 = vadd.f32 %v138, 0.0
    %v196 = vadd.f32 %v194, %v195
    %197 = vst [vmem:[%s193] sm:$0xf] %v196
    %s198 = scalar_lea.vmem [#allocation10], 28
    %v199 = vld [vmem:[%s198] sm:$0xf]
    %v200 = vadd.f32 %v107, 0.0
    %v201 = vadd.f32 %v199, %v200
    %202 = vst [vmem:[%s198] sm:$0xf] %v201
    %s203 = scalar_lea.vmem [#allocation10], 32
    %v204 = vld [vmem:[%s203] sm:$0xf]
    %v205 = vadd.f32 %v108, 0.0
    %v206 = vadd.f32 %v204, %v205
    %207 = vst [vmem:[%s203] sm:$0xf] %v206
    %v208 = vxor.u32 %v109, 2147483648
    %v209 = vmul.f32 %v208, 1.442695
    %v210 = vpow.pop %v209
    %v211 = vadd.f32 %v210, 1.0
    %v212 = vrcp.pop %v211
    %v213 = vmul.f32 %v211, %v212
    %v214 = vsub.f32 1.0, %v213
    %v215 = vmul.f32 %v212, %v214
    %v216 = vadd.f32 %v212, %v215
    %vm217 = vweird.f32 %v211
    %vm218 = vweird.f32 %v212
    %vm219 = vmor %vm217, %vm218
    %v220 = vsel %vm219, %v212, %v216
    %v221 = vand.u32 2147483647, %v211
    %vm222 = vcmp.eq.f32.partialorder %v221, 8.507059e+37
    %v223 = vand.u32 %v211, 2147483648
    %v224 = vor.u32 1.1754944e-38, %v223
    %v225 = vsel %vm222, %v224, %v220
    %v226 = vmul.f32 1.0, %v225
    %s227 = scalar_lea.vmem [#allocation10], 36
    %v228 = vld [vmem:[%s227] sm:$0xf]
    %v229 = vmul.f32 %v226, %v110
    %v230 = vadd.f32 %v229, 0.0
    %v231 = vadd.f32 %v228, %v230
    %232 = vst [vmem:[%s227] sm:$0xf] %v231
    %s233 = scalar_lea.vmem [#allocation10], 40
    %v234 = vld [vmem:[%s233] sm:$0xf]
    %v235 = vadd.f32 %v226, 0.0
    %v236 = vadd.f32 %v234, %v235
    %237 = vst [vmem:[%s233] sm:$0xf] %v236
    %s238 = scalar_lea.vmem [#allocation10], 44
    %v239 = vld [vmem:[%s238] sm:$0xf]
    %v240 = vadd.f32 %v110, 0.0
    %v241 = vadd.f32 %v239, %v240
    %242 = vst [vmem:[%s238] sm:$0xf] %v241
    %vm243 = vcmp.ne.f32.partialorder %v110, 255.0
    %v244 = vsel %vm243, 1, 0
    %v245 = vcvt.s32.f32 %v244
    %v246 = vmax.f32 %v226, 1e-06
    %v247 = vmin.f32 %v246, 0.999999
    %v248 = vmax.f32 %v110, 1e-06
    %v249 = vmin.f32 %v248, 0.999999
    %v250 = vsub.f32 1.0, %v249
    %v251 = vsub.f32 1.0, %v247
    %v252 = vmul.f32 %v250, %v251
    %v253 = vmul.f32 %v249, %v247
    %v254 = vadd.f32 %v252, %v253
    %v255 = vsub.f32 1.0, %v254
    %v256 = vmul.f32 %v255, %v255
    %v257 = vsub.f32 0.0, %v256
    %v258 = vlog2.pop %v254
    %v259 = vmul.f32 %v258, 0.6931472
    %v260 = vmul.f32 %v257, %v259
    %s261 = scalar_lea.vmem [#allocation10], 48
    %v262 = vld [vmem:[%s261] sm:$0xf]
    %v263 = vmul.f32 %v260, %v245
    %v264 = vadd.f32 %v263, 0.0
    %v265 = vadd.f32 %v262, %v264
    %266 = vst [vmem:[%s261] sm:$0xf] %v265
    %s267 = scalar_lea.vmem [#allocation10], 52
    %v268 = vld [vmem:[%s267] sm:$0xf]
    %v269 = vadd.f32 %v245, 0.0
    %v270 = vadd.f32 %v268, %v269
    %271 = vst [vmem:[%s267] sm:$0xf] %v270
    // Predicated region
    $region38: #{tpu_custom_call.1} parent=1 // pred_check
      _
    $region39: #{tpu_custom_call.1} parent=1 // pred_check_branch
      %273 = sbr.rel (0) target = $region41
    $region40: #{tpu_custom_call.1} parent=1 // pred_region
      %275 = vsyncadd [#allocation4], 0
      %s276 = sshll.u32 [#allocation10], 4
      %s277 = int_to_ptr.vmem [resolvable:$true] %s276
      %s278 = sshll.u32 %s4, 4
      %s279 = int_to_ptr.hbm [resolvable:$true] %s278
      %284 = dma.vmem_to_hbm [thread:$0]  %s277, 896, %s279, [#allocation4], 64, 64, 4
    $region41: #{tpu_custom_call.1} parent=1 // pred_fallthru
      _
    // Predicated region
    $region42: #{tpu_custom_call.1} parent=1 // pred_check
      _
    $region43: #{tpu_custom_call.1} parent=1 // pred_check_branch
      %286 = sbr.rel (0) target = $region45
    $region44: #{tpu_custom_call.1} parent=1 // pred_region
      %288 = dma.done [#allocation4], 896
    $region45: #{tpu_custom_call.1} parent=1 // pred_fallthru
      _
    %289 = vsyncpa [#allocation3], 1
    %290 = vsyncpa [#allocation6], 1
    %291 = vsyncpa [#allocation9], 1
    %292 = vsyncpa [#allocation4], 1

</llo_original>
